<compile_context>
chip_gen: v5e
topology: v5e:2x2
jax: 0.10.0
libtpu: 0.0.40
codegen_flags: <defaults>
</compile_context>

<pallas_src>
import jax
import jax.numpy as jnp
from jax import lax
from jax.experimental import pallas as pl
from jax.experimental.pallas import tpu as pltpu


def _reg_l1_kernel(feat_ref,   # (C, HW)  feature slab of this batch (input dtype)
                   ind_ref,    # (1, K)   int32 gather indices
                   mask_ref,   # (1, K)   f32 mask
                   tgt_ref,    # (C, K)   target (input dtype), K lane-dense
                   num_ref):   # (1, 1)   f32 per-batch numerator
    C, HW = feat_ref.shape
    K = ind_ref.shape[-1]

    # One-hot gather on the MXU: onehot[j, k] = (j == ind[k]).
    idx = ind_ref[...]                                        # (1, K) int32
    iota = lax.broadcasted_iota(jnp.int32, (HW, K), 0)        # (HW, K)
    onehot = (iota == idx).astype(feat_ref.dtype)             # (HW, K)

    # pred[c, k] = feat[c, ind[k]]  (exact: exactly one 1 per one-hot column;
    # out-of-range indices simply produce 0, never garbage reads).
    pred = jnp.dot(feat_ref[...], onehot,
                   preferred_element_type=jnp.float32)        # (C, K) f32

    tgt = tgt_ref[...].astype(jnp.float32)                    # (C, K)
    m = mask_ref[...].astype(jnp.float32)                     # (1, K)

    # |pred*m - tgt*m| == |(pred - tgt) * m| exactly, for ANY real mask.
    diff = jnp.abs((pred - tgt) * m)                          # (C, K)
    num_ref[...] = jnp.sum(diff, axis=(0, 1), keepdims=True)  # (1, 1)


def reg_l1_loss(output, mask, ind, target):
    """output: (B, C, H, W); mask: (B, K); ind: (B, K) int; target: (B, K, C)."""
    B, C, H, W = output.shape
    K = ind.shape[1]
    HW = H * W

    # Free view of NCHW: pred[b, k, c] = feat[b, c, ind[b, k]].  No HBM transpose.
    feat = output.reshape(B, C, HW)
    # Tiny (B*K*C / B*K) tensors: transpose/reshape so K is lane-dense.
    tgt_t = jnp.transpose(target, (0, 2, 1))                  # (B, C, K)
    mask3 = mask.astype(jnp.float32).reshape(B, 1, K)
    ind3 = ind.astype(jnp.int32).reshape(B, 1, K)

    # Per-batch numerator partials; den is a trivial XLA reduction (review #6).
    num = pl.pallas_call(
        _reg_l1_kernel,
        out_shape=jax.ShapeDtypeStruct((B, 1, 1), jnp.float32),
        grid=(B,),
        in_specs=[
            pl.BlockSpec((None, C, HW), lambda b: (b, 0, 0)),  # feature slab
            pl.BlockSpec((None, 1, K), lambda b: (b, 0, 0)),   # indices
            pl.BlockSpec((None, 1, K), lambda b: (b, 0, 0)),   # mask
            pl.BlockSpec((None, C, K), lambda b: (b, 0, 0)),   # target (C, K)
        ],
        out_specs=pl.BlockSpec((None, 1, 1), lambda b: (b, 0, 0)),
        compiler_params=pltpu.CompilerParams(
            dimension_semantics=("parallel",)),                # megacore on v7x
    )(feat, ind3, mask3, tgt_t)
    # TODO(synk): for very large HW*K, tile HW inside the kernel to bound the
    # (HW, K) one-hot intermediate; unnecessary at CenterNet sizes.

    den = jnp.sum(mask.astype(jnp.float32)) * C               # expanded-mask sum
    return jnp.sum(num) / (den + 1e-4)


def _reference(output, mask, ind, target):
    B, C, H, W = output.shape
    K = ind.shape[1]
    feat = jnp.transpose(output, (0, 2, 3, 1)).reshape(B, H * W, C)
    idx = jnp.broadcast_to(ind[:, :, None].astype(jnp.int32), (B, K, C))
    pred = jnp.take_along_axis(feat, idx, axis=1)
    m = jnp.broadcast_to(mask[:, :, None].astype(jnp.float32), (B, K, C))
    num = jnp.sum(jnp.abs(pred * m - target * m))
    return num / (jnp.sum(m) + 1e-4)


if __name__ == "__main__":
    key = jax.random.PRNGKey(0)
    k1, k2, k3, k4 = jax.random.split(key, 4)

    B, C, H, W, K = 2, 4, 16, 16, 8

    output = jax.random.normal(k1, (B, C, H, W), dtype=jnp.float32)
    ind = jax.random.randint(k2, (B, K), 0, H * W, dtype=jnp.int32)
    mask = (jax.random.uniform(k3, (B, K)) > 0.3).astype(jnp.float32)
    target = jax.random.normal(k4, (B, K, C), dtype=jnp.float32)

    loss = jax.block_until_ready(reg_l1_loss(output, mask, ind, target))

    ref = _reference(output, mask, ind, target)
    assert jnp.allclose(loss, ref, rtol=1e-5, atol=1e-5), (loss, ref)

    print("KERNEL_OK")
</pallas_src>

<mosaic_0001>
module attributes {stable_mosaic.version = 11 : i64} {
  func.func @_reg_l1_kernel(%arg0: i32, %arg1: memref<1x4x256xf32, #tpu.memory_space<vmem>>, %arg2: memref<1x1x8xi32, #tpu.memory_space<vmem>>, %arg3: memref<1x1x8xf32, #tpu.memory_space<vmem>>, %arg4: memref<1x4x8xf32, #tpu.memory_space<vmem>>, %arg5: memref<1x1x1xf32, #tpu.memory_space<vmem>>) attributes {dimension_semantics = [#tpu.dimension_semantics<parallel>], iteration_bounds = array<i64: 2>, scalar_prefetch = 0 : i64, scratch_operands = 0 : i64, tpu.core_type = #tpu.core_type<tc>, window_params = [{transform_indices = @transform_0, window_bounds = array<i64: 1, 4, 256>}, {transform_indices = @transform_1, window_bounds = array<i64: 1, 1, 8>}, {transform_indices = @transform_2, window_bounds = array<i64: 1, 1, 8>}, {transform_indices = @transform_3, window_bounds = array<i64: 1, 4, 8>}, {transform_indices = @transform_4, window_bounds = array<i64: 1, 1, 1>}]} {
    %c0 = arith.constant 0 : index
    %c0_0 = arith.constant 0 : index
    %c0_1 = arith.constant 0 : index
    %0 = vector.load %arg2[%c0, %c0_0, %c0_1] : memref<1x1x8xi32, #tpu.memory_space<vmem>>, vector<1x1x8xi32>
    %1 = vector.shape_cast %0 : vector<1x1x8xi32> to vector<1x8xi32>
    %2 = tpu.iota {dimensions = array<i32: 0>} : vector<256x8xi32>
    %3 = vector.broadcast %1 : vector<1x8xi32> to vector<256x8xi32>
    %4 = arith.cmpi eq, %2, %3 : vector<256x8xi32>
    %5 = arith.extui %4 : vector<256x8xi1> to vector<256x8xi32>
    %6 = arith.sitofp %5 : vector<256x8xi32> to vector<256x8xf32>
    %c0_2 = arith.constant 0 : index
    %c0_3 = arith.constant 0 : index
    %c0_4 = arith.constant 0 : index
    %7 = vector.load %arg1[%c0_2, %c0_3, %c0_4] : memref<1x4x256xf32, #tpu.memory_space<vmem>>, vector<1x4x256xf32>
    %8 = vector.shape_cast %7 : vector<1x4x256xf32> to vector<4x256xf32>
    %cst = arith.constant dense<0.000000e+00> : vector<4x8xf32>
    %9 = tpu.matmul %8, %6, %cst {dimension_numbers = #tpu.dot_dimension_numbers<[1], [0], [0], [1], [0, 0, 1, 1], [], []>} : vector<4x256xf32>, vector<256x8xf32>, vector<4x8xf32> -> vector<4x8xf32>
    %c0_5 = arith.constant 0 : index
    %c0_6 = arith.constant 0 : index
    %c0_7 = arith.constant 0 : index
    %10 = vector.load %arg4[%c0_5, %c0_6, %c0_7] : memref<1x4x8xf32, #tpu.memory_space<vmem>>, vector<1x4x8xf32>
    %11 = vector.shape_cast %10 : vector<1x4x8xf32> to vector<4x8xf32>
    %c0_8 = arith.constant 0 : index
    %c0_9 = arith.constant 0 : index
    %c0_10 = arith.constant 0 : index
    %12 = vector.load %arg3[%c0_8, %c0_9, %c0_10] : memref<1x1x8xf32, #tpu.memory_space<vmem>>, vector<1x1x8xf32>
    %13 = vector.shape_cast %12 : vector<1x1x8xf32> to vector<1x8xf32>
    %14 = arith.subf %9, %11 : vector<4x8xf32>
    %15 = vector.broadcast %13 : vector<1x8xf32> to vector<4x8xf32>
    %16 = arith.mulf %14, %15 : vector<4x8xf32>
    %17 = math.absf %16 : vector<4x8xf32>
    %18 = vector.shape_cast %17 : vector<4x8xf32> to vector<1x4x8xf32>
    %cst_11 = arith.constant dense<0.000000e+00> : vector<1xf32>
    %19 = vector.multi_reduction <add>, %18, %cst_11 [1, 2] : vector<1x4x8xf32> to vector<1xf32>
    %20 = vector.shape_cast %19 : vector<1xf32> to vector<1x1x1xf32>
    %21 = vector.extract %20[0, 0, 0] : f32 from vector<1x1x1xf32>
    %22 = vector.broadcast %21 : f32 to vector<1x1xf32>
    %c0_12 = arith.constant 0 : index
    %c0_13 = arith.constant 0 : index
    %c0_14 = arith.constant 0 : index
    %23 = vector.load %arg5[%c0_12, %c0_13, %c0_14] : memref<1x1x1xf32, #tpu.memory_space<vmem>>, vector<1x1x1xf32>
    %24 = vector.shape_cast %23 : vector<1x1x1xf32> to vector<1x1xf32>
    %25 = vector.shape_cast %22 : vector<1x1xf32> to vector<1x1x1xf32>
    tpu.vector_store %arg5[%c0_12, %c0_13, %c0_14], %25 {strides = array<i32>} : memref<1x1x1xf32, #tpu.memory_space<vmem>>, vector<1x1x1xf32>,
    return
  }
  func.func @transform_0(%arg0: i32) -> (i32, i32, i32) {
    %c0_i32 = arith.constant 0 : i32
    %c0_i32_0 = arith.constant 0 : i32
    %c0_i32_1 = arith.constant 0 : i32
    return %arg0, %c0_i32, %c0_i32_0 : i32, i32, i32
  }
  func.func @transform_1(%arg0: i32) -> (i32, i32, i32) {
    %c0_i32 = arith.constant 0 : i32
    %c0_i32_0 = arith.constant 0 : i32
    %c0_i32_1 = arith.constant 0 : i32
    return %arg0, %c0_i32, %c0_i32_0 : i32, i32, i32
  }
  func.func @transform_2(%arg0: i32) -> (i32, i32, i32) {
    %c0_i32 = arith.constant 0 : i32
    %c0_i32_0 = arith.constant 0 : i32
    %c0_i32_1 = arith.constant 0 : i32
    return %arg0, %c0_i32, %c0_i32_0 : i32, i32, i32
  }
  func.func @transform_3(%arg0: i32) -> (i32, i32, i32) {
    %c0_i32 = arith.constant 0 : i32
    %c0_i32_0 = arith.constant 0 : i32
    %c0_i32_1 = arith.constant 0 : i32
    return %arg0, %c0_i32, %c0_i32_0 : i32, i32, i32
  }
  func.func @transform_4(%arg0: i32) -> (i32, i32, i32) {
    %c0_i32 = arith.constant 0 : i32
    %c0_i32_0 = arith.constant 0 : i32
    %c0_i32_1 = arith.constant 0 : i32
    return %arg0, %c0_i32, %c0_i32_0 : i32, i32, i32
  }
}

</mosaic_0001>

<llo_original>
// kernel: tpu_custom_call.1
$region0: #{tpu_custom_call.1}
  #allocation0 [shape = 'u32[]', space=smem, size = 0x4, offset = 0x4, fixed_abs, tag = 'smem constant byte address 0x4 - core index']
  #allocation1 [shape = 'u32[72,128]{1,0:T(1,128)}', space=vmem, size = 0x9000, scoped, tag = 'internal scratch']
  %s0 = inlined_call_operand.hbm [shape: f32[2,4,256], index: 0, kind: input, shape index: {}]
  %s1 = inlined_call_operand.hbm [shape: s32[2,1,8], index: 1, kind: input, shape index: {}]
  %s2 = inlined_call_operand.hbm [shape: f32[2,1,8], index: 2, kind: input, shape index: {}]
  %s3 = inlined_call_operand.hbm [shape: f32[2,4,8], index: 3, kind: input, shape index: {}]
  %s4 = inlined_call_operand.vmem [shape: f32[2,1,1], index: 4, kind: output, shape index: {}]
  %s5 = sld [smem:[#allocation0]]
  $region65: #{tpu_custom_call.1} parent=0
    _
  %s7 = ssub.s32 1, %s5
  %s8 = scalar_select 0, %s7, %s5
  $region1: #{tpu_custom_call.1} parent=0
    #allocation2 [shape = 'u8[8192]{0}', space=vmem, size = 0x2000, scoped, tag = 'input window, operand 0']
    #allocation3 [shape = 's32[2]{0}', space=sflag, size = 0x8, scoped, tag = 'scoped memory for tpu_custom_call.1']
    #allocation4 [shape = 'u8[1024]{0}', space=vmem, size = 0x400, scoped, tag = 'input window, operand 1']
    #allocation5 [shape = 's32[2]{0}', space=sflag, size = 0x8, scoped, tag = 'scoped memory for tpu_custom_call.1']
    #allocation6 [shape = 'u8[1024]{0}', space=vmem, size = 0x400, scoped, tag = 'input window, operand 2']
    #allocation7 [shape = 'u8[4096]{0}', space=vmem, size = 0x1000, scoped, tag = 'input window, operand 3']
    #allocation8 [shape = 's32[2]{0}', space=sflag, size = 0x8, scoped, tag = 'scoped memory for tpu_custom_call.1']
    %9 = vsyncpa [#allocation3], 0
    %s10 = scalar_lea.sflag [#allocation3], 1
    %11 = vsyncpa %s10, 0
    %12 = vsyncpa [#allocation5], 0
    %s13 = scalar_lea.sflag [#allocation5], 1
    %14 = vsyncpa %s13, 0
    %15 = vsyncpa [#allocation8], 0
    %s16 = scalar_lea.sflag [#allocation8], 1
    %17 = vsyncpa %s16, 0
    loop: start=0, step=1, limit=4
    $region2: #{tpu_custom_call.1} parent=1 // loop_pre_header
      _
    $region3: #{tpu_custom_call.1} parent=1 // loop_header
      %s19 = sphi 0, %s23
      %p20 = scmp.ge.s32.totalorder %s19, 4
      %s29 = sphi 0, %s31
      %s32 = sphi 0, %s29
      %s33 = sphi 0, %s32
      %s49 = sphi 0, %s33
      %s55 = sphi 0, %s57
      %s58 = sphi 0, %s55
      %s59 = sphi 0, %s58
      %s75 = sphi 0, %s59
      %s81 = sphi 0, %s83
      %s84 = sphi 0, %s81
      %s85 = sphi 0, %s84
      %s101 = sphi 0, %s85
      %s107 = sphi 0, %s109
      %s110 = sphi 0, %s107
      %s111 = sphi 0, %s110
      %s127 = sphi 0, %s111
      %s133 = sphi 0, %s135
      %s136 = sphi 0, %s133
      %s137 = sphi 0, %s136
      %s153 = sphi 0, %s137
    $region4: #{tpu_custom_call.1} parent=1 // loop_header_branch
      %22 = sbr.rel (%p20) target = $region8
    $region5: #{tpu_custom_call.1} parent=1 // loop_body
      %s24 = ssub.s32 %s19, 1
      %s25 = ssub.s32 %s19, 2
      %s26 = sadd.s32 %s19, 1
      %s27 = ssub.s32 %s19, %s26
      %p28 = scmp.eq.s32.totalorder %s27, 0
      %s30 = sadd.s32 %s29, 1
      %s31 = scalar_select %p28, %s29, %s30
      %p34 = pneg %p28
      %p35 = scmp.eq.s32.totalorder %s19, 1
      %p36 = por %p34, %p35
      %p37 = scmp.ne.s32.totalorder %s29, %s32
      %p38 = scmp.eq.s32.totalorder %s19, 0
      %p39 = por %p37, %p38
      %p40 = scmp.ne.s32.totalorder %s29, %s32
      %p41 = scmp.eq.s32.totalorder %s24, 1
      %p42 = por %p40, %p41
      %p43 = scmp.ne.s32.totalorder %s32, %s33
      %p44 = scmp.eq.s32.totalorder %s24, 0
      %p45 = por %p43, %p44
      %p46 = scmp.ne.s32.totalorder %s32, %s33
      %p47 = scmp.eq.s32.totalorder %s25, 1
      %p48 = por %p46, %p47
      %p50 = scmp.ne.s32.totalorder %s33, %s49
      %p51 = scmp.eq.s32.totalorder %s25, 0
      %p52 = por %p50, %p51
      %s53 = ssub.s32 %s19, %s26
      %p54 = scmp.eq.s32.totalorder %s53, 0
      %s56 = sadd.s32 %s55, 1
      %s57 = scalar_select %p54, %s55, %s56
      %p60 = pneg %p54
      %p61 = scmp.eq.s32.totalorder %s19, 1
      %p62 = por %p60, %p61
      %p63 = scmp.ne.s32.totalorder %s55, %s58
      %p64 = scmp.eq.s32.totalorder %s19, 0
      %p65 = por %p63, %p64
      %p66 = scmp.ne.s32.totalorder %s55, %s58
      %p67 = scmp.eq.s32.totalorder %s24, 1
      %p68 = por %p66, %p67
      %p69 = scmp.ne.s32.totalorder %s58, %s59
      %p70 = scmp.eq.s32.totalorder %s24, 0
      %p71 = por %p69, %p70
      %p72 = scmp.ne.s32.totalorder %s58, %s59
      %p73 = scmp.eq.s32.totalorder %s25, 1
      %p74 = por %p72, %p73
      %p76 = scmp.ne.s32.totalorder %s59, %s75
      %p77 = scmp.eq.s32.totalorder %s25, 0
      %p78 = por %p76, %p77
      %s79 = ssub.s32 %s19, %s26
      %p80 = scmp.eq.s32.totalorder %s79, 0
      %s82 = sadd.s32 %s81, 1
      %s83 = scalar_select %p80, %s81, %s82
      %p86 = pneg %p80
      %p87 = scmp.eq.s32.totalorder %s19, 1
      %p88 = por %p86, %p87
      %p89 = scmp.ne.s32.totalorder %s81, %s84
      %p90 = scmp.eq.s32.totalorder %s19, 0
      %p91 = por %p89, %p90
      %p92 = scmp.ne.s32.totalorder %s81, %s84
      %p93 = scmp.eq.s32.totalorder %s24, 1
      %p94 = por %p92, %p93
      %p95 = scmp.ne.s32.totalorder %s84, %s85
      %p96 = scmp.eq.s32.totalorder %s24, 0
      %p97 = por %p95, %p96
      %p98 = scmp.ne.s32.totalorder %s84, %s85
      %p99 = scmp.eq.s32.totalorder %s25, 1
      %p100 = por %p98, %p99
      %p102 = scmp.ne.s32.totalorder %s85, %s101
      %p103 = scmp.eq.s32.totalorder %s25, 0
      %p104 = por %p102, %p103
      %s105 = ssub.s32 %s19, %s26
      %p106 = scmp.eq.s32.totalorder %s105, 0
      %s108 = sadd.s32 %s107, 1
      %s109 = scalar_select %p106, %s107, %s108
      %p112 = pneg %p106
      %p113 = scmp.eq.s32.totalorder %s19, 1
      %p114 = por %p112, %p113
      %p115 = scmp.ne.s32.totalorder %s107, %s110
      %p116 = scmp.eq.s32.totalorder %s19, 0
      %p117 = por %p115, %p116
      %p118 = scmp.ne.s32.totalorder %s107, %s110
      %p119 = scmp.eq.s32.totalorder %s24, 1
      %p120 = por %p118, %p119
      %p121 = scmp.ne.s32.totalorder %s110, %s111
      %p122 = scmp.eq.s32.totalorder %s24, 0
      %p123 = por %p121, %p122
      %p124 = scmp.ne.s32.totalorder %s110, %s111
      %p125 = scmp.eq.s32.totalorder %s25, 1
      %p126 = por %p124, %p125
      %p128 = scmp.ne.s32.totalorder %s111, %s127
      %p129 = scmp.eq.s32.totalorder %s25, 0
      %p130 = por %p128, %p129
      %s131 = ssub.s32 %s19, %s26
      %p132 = scmp.eq.s32.totalorder %s131, 0
      %s134 = sadd.s32 %s133, 1
      %s135 = scalar_select %p132, %s133, %s134
      %p138 = pneg %p132
      %p139 = scmp.eq.s32.totalorder %s19, 1
      %p140 = por %p138, %p139
      %p141 = scmp.ne.s32.totalorder %s133, %s136
      %p142 = scmp.eq.s32.totalorder %s19, 0
      %p143 = por %p141, %p142
      %p144 = scmp.ne.s32.totalorder %s133, %s136
      %p145 = scmp.eq.s32.totalorder %s24, 1
      %p146 = por %p144, %p145
      %p147 = scmp.ne.s32.totalorder %s136, %s137
      %p148 = scmp.eq.s32.totalorder %s24, 0
      %p149 = por %p147, %p148
      %p150 = scmp.ne.s32.totalorder %s136, %s137
      %p151 = scmp.eq.s32.totalorder %s25, 1
      %p152 = por %p150, %p151
      %p154 = scmp.ne.s32.totalorder %s137, %s153
      %p155 = scmp.eq.s32.totalorder %s25, 0
      %p156 = por %p154, %p155
      %p157 = scmp.le.s32.totalorder 1, %s19
      %p158 = scmp.lt.s32.totalorder %s19, 3
      %p159 = pnand %p157, %p158
      %p160 = pneg %p159
      // Predicated region
      $region9: #{tpu_custom_call.1} parent=5 // pred_check
        _
      $region10: #{tpu_custom_call.1} parent=5 // pred_check_branch
        %162 = sbr.rel (%p159) target = $region12
      $region11: #{tpu_custom_call.1} parent=5 // pred_region
        %s163 = ssub.s32 %s19, 1
      $region12: #{tpu_custom_call.1} parent=5 // pred_fallthru
        _
      %p164 = scmp.lt.s32.totalorder %s19, 2
      // Predicated region
      $region13: #{tpu_custom_call.1} parent=5 // pred_check
        %p165 = pneg %p164
      $region14: #{tpu_custom_call.1} parent=5 // pred_check_branch
        %167 = sbr.rel (%p165) target = $region16
      $region15: #{tpu_custom_call.1} parent=5 // pred_region
        // Predicated region
        $region17: #{tpu_custom_call.1} parent=15 // pred_check
          %p168 = pneg %p39
        $region18: #{tpu_custom_call.1} parent=15 // pred_check_branch
          %170 = sbr.rel (%p168) target = $region20
        $region19: #{tpu_custom_call.1} parent=15 // pred_region
          %s171 = sand.u32 %s29, 1
          %s172 = scalar_lea.sflag [#allocation3], %s171
          %s173 = sand.u32 %s29, 1
          %s174 = smul.addr %s173, 8
          %s175 = scalar_lea.vmem [#allocation2], %s174
          %177 = vsyncadd %s172, 0
          %s178 = smul.addr %s19, 2
          %s179 = smul.addr %s178, 4
          %s180 = scalar_lea.hbm %s0, %s179
          %s182 = sshll.u32 %s180, 4
          %s183 = int_to_ptr.hbm [resolvable:$true] %s182
          %s184 = sshll.u32 %s175, 4
          %s185 = int_to_ptr.vmem [resolvable:$true] %s184
          %187 = dma.hbm_to_vmem [thread:$0]  %s183, 128, %s185, %s172
        $region20: #{tpu_custom_call.1} parent=15 // pred_fallthru
          _
        // Predicated region
        $region21: #{tpu_custom_call.1} parent=15 // pred_check
          %p188 = pneg %p65
        $region22: #{tpu_custom_call.1} parent=15 // pred_check_branch
          %190 = sbr.rel (%p188) target = $region24
        $region23: #{tpu_custom_call.1} parent=15 // pred_region
          %s191 = sand.u32 %s19, 1
          %s192 = scalar_lea.sflag [#allocation5], %s191
          %s193 = sand.u32 %s55, 1
          %s194 = scalar_lea.vmem [#allocation4], %s193
          %196 = vsyncadd %s192, 0
          %s197 = scalar_lea.hbm %s1, %s19
          %s199 = sshll.u32 %s197, 4
          %s200 = int_to_ptr.hbm [resolvable:$true] %s199
          %s201 = sshll.u32 %s194, 4
          %s202 = int_to_ptr.vmem [resolvable:$true] %s201
          %204 = dma.hbm_to_vmem [thread:$0]  %s200, 16, %s202, %s192
        $region24: #{tpu_custom_call.1} parent=15 // pred_fallthru
          _
        // Predicated region
        $region25: #{tpu_custom_call.1} parent=15 // pred_check
          %p205 = pneg %p91
        $region26: #{tpu_custom_call.1} parent=15 // pred_check_branch
          %207 = sbr.rel (%p205) target = $region28
        $region27: #{tpu_custom_call.1} parent=15 // pred_region
          %s208 = sand.u32 %s19, 1
          %s209 = scalar_lea.sflag [#allocation5], %s208
          %s210 = sand.u32 %s81, 1
          %s211 = scalar_lea.vmem [#allocation6], %s210
          %213 = vsyncadd %s209, 0
          %s214 = scalar_lea.hbm %s2, %s19
          %s216 = sshll.u32 %s214, 4
          %s217 = int_to_ptr.hbm [resolvable:$true] %s216
          %s218 = sshll.u32 %s211, 4
          %s219 = int_to_ptr.vmem [resolvable:$true] %s218
          %221 = dma.hbm_to_vmem [thread:$0]  %s217, 16, %s219, %s209
        $region28: #{tpu_custom_call.1} parent=15 // pred_fallthru
          _
        // Predicated region
        $region29: #{tpu_custom_call.1} parent=15 // pred_check
          %p222 = pneg %p117
        $region30: #{tpu_custom_call.1} parent=15 // pred_check_branch
          %224 = sbr.rel (%p222) target = $region32
        $region31: #{tpu_custom_call.1} parent=15 // pred_region
          %s225 = sand.u32 %s107, 1
          %s226 = scalar_lea.sflag [#allocation8], %s225
          %s227 = sand.u32 %s107, 1
          %s228 = smul.addr %s227, 4
          %s229 = scalar_lea.vmem [#allocation7], %s228
          %231 = vsyncadd %s226, 0
          %s232 = smul.addr %s19, 4
          %s233 = scalar_lea.hbm %s3, %s232
          %s235 = sshll.u32 %s233, 4
          %s236 = int_to_ptr.hbm [resolvable:$true] %s235
          %s237 = sshll.u32 %s229, 4
          %s238 = int_to_ptr.vmem [resolvable:$true] %s237
          %240 = dma.hbm_to_vmem [thread:$0]  %s236, 64, %s238, %s226
        $region32: #{tpu_custom_call.1} parent=15 // pred_fallthru
          _
      $region16: #{tpu_custom_call.1} parent=5 // pred_fallthru
        _
      %p241 = scmp.le.s32.totalorder 1, %s19
      %p242 = scmp.lt.s32.totalorder %s19, 3
      %p243 = pnand %p241, %p242
      %p244 = pneg %p243
      // Predicated region
      $region33: #{tpu_custom_call.1} parent=5 // pred_check
        _
      $region34: #{tpu_custom_call.1} parent=5 // pred_check_branch
        %246 = sbr.rel (%p243) target = $region36
      $region35: #{tpu_custom_call.1} parent=5 // pred_region
        %s247 = ssub.s32 %s19, 1
        %s248 = sand.u32 %s32, 1
        %s249 = scalar_lea.sflag [#allocation3], %s248
        %s250 = sand.u32 %s32, 1
        %s251 = smul.addr %s250, 8
        %s252 = scalar_lea.vmem [#allocation2], %s251
        // Predicated region
        $region37: #{tpu_custom_call.1} parent=35 // pred_check
          %p253 = pneg %p45
        $region38: #{tpu_custom_call.1} parent=35 // pred_check_branch
          %255 = sbr.rel (%p253) target = $region40
        $region39: #{tpu_custom_call.1} parent=35 // pred_region
          %257 = dma.done %s249, 128
        $region40: #{tpu_custom_call.1} parent=35 // pred_fallthru
          _
        %s258 = sand.u32 %s24, 1
        %s259 = scalar_lea.sflag [#allocation5], %s258
        %s260 = sand.u32 %s58, 1
        %s261 = scalar_lea.vmem [#allocation4], %s260
        // Predicated region
        $region41: #{tpu_custom_call.1} parent=35 // pred_check
          %p262 = pneg %p71
        $region42: #{tpu_custom_call.1} parent=35 // pred_check_branch
          %264 = sbr.rel (%p262) target = $region44
        $region43: #{tpu_custom_call.1} parent=35 // pred_region
          %266 = dma.done %s259, 16
        $region44: #{tpu_custom_call.1} parent=35 // pred_fallthru
          _
        %s267 = sand.u32 %s24, 1
        %s268 = scalar_lea.sflag [#allocation5], %s267
        %s269 = sand.u32 %s84, 1
        %s270 = scalar_lea.vmem [#allocation6], %s269
        // Predicated region
        $region45: #{tpu_custom_call.1} parent=35 // pred_check
          %p271 = pneg %p97
        $region46: #{tpu_custom_call.1} parent=35 // pred_check_branch
          %273 = sbr.rel (%p271) target = $region48
        $region47: #{tpu_custom_call.1} parent=35 // pred_region
          %275 = dma.done %s268, 16
        $region48: #{tpu_custom_call.1} parent=35 // pred_fallthru
          _
        %s276 = sand.u32 %s110, 1
        %s277 = scalar_lea.sflag [#allocation8], %s276
        %s278 = sand.u32 %s110, 1
        %s279 = smul.addr %s278, 4
        %s280 = scalar_lea.vmem [#allocation7], %s279
        // Predicated region
        $region49: #{tpu_custom_call.1} parent=35 // pred_check
          %p281 = pneg %p123
        $region50: #{tpu_custom_call.1} parent=35 // pred_check_branch
          %283 = sbr.rel (%p281) target = $region52
        $region51: #{tpu_custom_call.1} parent=35 // pred_region
          %285 = dma.done %s277, 64
        $region52: #{tpu_custom_call.1} parent=35 // pred_fallthru
          _
        %s286 = sand.u32 %s32, 1
        %s287 = scalar_lea.sflag [#allocation3], %s286
        %s288 = sand.u32 %s32, 1
        %s289 = smul.addr %s288, 8
        %s290 = scalar_lea.vmem [#allocation2], %s289
        %p291 = pneg %p45
        %p292 = pneg %p42
        %s293 = sand.u32 %s24, 1
        %s294 = scalar_lea.sflag [#allocation5], %s293
        %s295 = sand.u32 %s58, 1
        %s296 = scalar_lea.vmem [#allocation4], %s295
        %p297 = pneg %p71
        %p298 = pneg %p68
        %s299 = sand.u32 %s24, 1
        %s300 = scalar_lea.sflag [#allocation5], %s299
        %s301 = sand.u32 %s84, 1
        %s302 = scalar_lea.vmem [#allocation6], %s301
        %p303 = pneg %p97
        %p304 = pneg %p94
        %s305 = sand.u32 %s110, 1
        %s306 = scalar_lea.sflag [#allocation8], %s305
        %s307 = sand.u32 %s110, 1
        %s308 = smul.addr %s307, 4
        %s309 = scalar_lea.vmem [#allocation7], %s308
        %p310 = pneg %p123
        %p311 = pneg %p120
        %p312 = pneg %p149
        %p313 = pneg %p146
        %p314 = scmp.lt.s32.totalorder %s24, 1
        %s315 = scalar_select %p314, %s24, 1
        %s316 = scalar_lea.vmem %s4, %s315
        %p317 = scmp.lt.s32.totalorder %s24, 1
        %s318 = scalar_select %p317, %s24, 1
        %s319 = scalar_lea.vmem %s4, %s318
        %v320 = vld [vmem:[%s261] sm:$0x1]
        %v321 = vlaneseq
        %v322 = vshrl.u32 %v321, 7
        %v323 = vadd.s32 %v322, 8
        %v324 = vadd.s32 %v322, 16
        %v325 = vadd.s32 %v322, 24
        %v326 = vadd.s32 %v322, 32
        %v327 = vadd.s32 %v322, 40
        %v328 = vadd.s32 %v322, 48
        %v329 = vadd.s32 %v322, 56
        %v330 = vadd.s32 %v322, 64
        %v331 = vadd.s32 %v322, 72
        %v332 = vadd.s32 %v322, 80
        %v333 = vadd.s32 %v322, 88
        %v334 = vadd.s32 %v322, 96
        %v335 = vadd.s32 %v322, 104
        %v336 = vadd.s32 %v322, 112
        %v337 = vadd.s32 %v322, 120
        %v338 = vadd.s32 %v322, 128
        %v339 = vadd.s32 %v322, 136
        %v340 = vadd.s32 %v322, 144
        %v341 = vadd.s32 %v322, 152
        %v342 = vadd.s32 %v322, 160
        %v343 = vadd.s32 %v322, 168
        %v344 = vadd.s32 %v322, 176
        %v345 = vadd.s32 %v322, 184
        %v346 = vadd.s32 %v322, 192
        %v347 = vadd.s32 %v322, 200
        %v348 = vadd.s32 %v322, 208
        %v349 = vadd.s32 %v322, 216
        %v350 = vadd.s32 %v322, 224
        %v351 = vadd.s32 %v322, 232
        %v352 = vadd.s32 %v322, 240
        %v353 = vadd.s32 %v322, 248
        %v354 = vperm.slane %v320, 0
        %vm355 = vcmp.eq.s32.totalorder %v322, %v354
        %vm356 = vcmp.eq.s32.totalorder %v323, %v354
        %vm357 = vcmp.eq.s32.totalorder %v324, %v354
        %vm358 = vcmp.eq.s32.totalorder %v325, %v354
        %vm359 = vcmp.eq.s32.totalorder %v326, %v354
        %vm360 = vcmp.eq.s32.totalorder %v327, %v354
        %vm361 = vcmp.eq.s32.totalorder %v328, %v354
        %vm362 = vcmp.eq.s32.totalorder %v329, %v354
        %vm363 = vcmp.eq.s32.totalorder %v330, %v354
        %vm364 = vcmp.eq.s32.totalorder %v331, %v354
        %vm365 = vcmp.eq.s32.totalorder %v332, %v354
        %vm366 = vcmp.eq.s32.totalorder %v333, %v354
        %vm367 = vcmp.eq.s32.totalorder %v334, %v354
        %vm368 = vcmp.eq.s32.totalorder %v335, %v354
        %vm369 = vcmp.eq.s32.totalorder %v336, %v354
        %vm370 = vcmp.eq.s32.totalorder %v337, %v354
        %vm371 = vcmp.eq.s32.totalorder %v338, %v354
        %vm372 = vcmp.eq.s32.totalorder %v339, %v354
        %vm373 = vcmp.eq.s32.totalorder %v340, %v354
        %vm374 = vcmp.eq.s32.totalorder %v341, %v354
        %vm375 = vcmp.eq.s32.totalorder %v342, %v354
        %vm376 = vcmp.eq.s32.totalorder %v343, %v354
        %vm377 = vcmp.eq.s32.totalorder %v344, %v354
        %vm378 = vcmp.eq.s32.totalorder %v345, %v354
        %vm379 = vcmp.eq.s32.totalorder %v346, %v354
        %vm380 = vcmp.eq.s32.totalorder %v347, %v354
        %vm381 = vcmp.eq.s32.totalorder %v348, %v354
        %vm382 = vcmp.eq.s32.totalorder %v349, %v354
        %vm383 = vcmp.eq.s32.totalorder %v350, %v354
        %vm384 = vcmp.eq.s32.totalorder %v351, %v354
        %vm385 = vcmp.eq.s32.totalorder %v352, %v354
        %vm386 = vcmp.eq.s32.totalorder %v353, %v354
        %v387 = vsel %vm355, 1, 0
        %v388 = vsel %vm356, 1, 0
        %v389 = vsel %vm357, 1, 0
        %v390 = vsel %vm358, 1, 0
        %v391 = vsel %vm359, 1, 0
        %v392 = vsel %vm360, 1, 0
        %v393 = vsel %vm361, 1, 0
        %v394 = vsel %vm362, 1, 0
        %v395 = vsel %vm363, 1, 0
        %v396 = vsel %vm364, 1, 0
        %v397 = vsel %vm365, 1, 0
        %v398 = vsel %vm366, 1, 0
        %v399 = vsel %vm367, 1, 0
        %v400 = vsel %vm368, 1, 0
        %v401 = vsel %vm369, 1, 0
        %v402 = vsel %vm370, 1, 0
        %v403 = vsel %vm371, 1, 0
        %v404 = vsel %vm372, 1, 0
        %v405 = vsel %vm373, 1, 0
        %v406 = vsel %vm374, 1, 0
        %v407 = vsel %vm375, 1, 0
        %v408 = vsel %vm376, 1, 0
        %v409 = vsel %vm377, 1, 0
        %v410 = vsel %vm378, 1, 0
        %v411 = vsel %vm379, 1, 0
        %v412 = vsel %vm380, 1, 0
        %v413 = vsel %vm381, 1, 0
        %v414 = vsel %vm382, 1, 0
        %v415 = vsel %vm383, 1, 0
        %v416 = vsel %vm384, 1, 0
        %v417 = vsel %vm385, 1, 0
        %v418 = vsel %vm386, 1, 0
        %v419 = vcvt.s32.f32 %v387
        %v420 = vcvt.s32.f32 %v388
        %v421 = vcvt.s32.f32 %v389
        %v422 = vcvt.s32.f32 %v390
        %v423 = vcvt.s32.f32 %v391
        %v424 = vcvt.s32.f32 %v392
        %v425 = vcvt.s32.f32 %v393
        %v426 = vcvt.s32.f32 %v394
        %v427 = vcvt.s32.f32 %v395
        %v428 = vcvt.s32.f32 %v396
        %v429 = vcvt.s32.f32 %v397
        %v430 = vcvt.s32.f32 %v398
        %v431 = vcvt.s32.f32 %v399
        %v432 = vcvt.s32.f32 %v400
        %v433 = vcvt.s32.f32 %v401
        %v434 = vcvt.s32.f32 %v402
        %v435 = vcvt.s32.f32 %v403
        %v436 = vcvt.s32.f32 %v404
        %v437 = vcvt.s32.f32 %v405
        %v438 = vcvt.s32.f32 %v406
        %v439 = vcvt.s32.f32 %v407
        %v440 = vcvt.s32.f32 %v408
        %v441 = vcvt.s32.f32 %v409
        %v442 = vcvt.s32.f32 %v410
        %v443 = vcvt.s32.f32 %v411
        %v444 = vcvt.s32.f32 %v412
        %v445 = vcvt.s32.f32 %v413
        %v446 = vcvt.s32.f32 %v414
        %v447 = vcvt.s32.f32 %v415
        %v448 = vcvt.s32.f32 %v416
        %v449 = vcvt.s32.f32 %v417
        %v450 = vcvt.s32.f32 %v418
        %v451 = vld [vmem:[%s252] sm:$0xff]
        %453 = vst [vmem:[#allocation1] ss:$2 sm:$0xff] %v451
        %v454 = vld.sshfl [vmem:[#allocation1] sm:$0xff pattern:$0x75316420]
        %v455 = vld.sshfl [vmem:[#allocation1 + $0x8] sm:$0xff pattern:$0x75316420]
        %458 = vmatpush.msra.mxu0 %v434
        %459 = vmatpush.msra.mxu0 %v433
        %460 = vmatpush.msra.mxu0 %v432
        %461 = vmatpush.msra.mxu0 %v431
        %462 = vmatpush.msra.mxu0 %v430
        %463 = vmatpush.msra.mxu0 %v429
        %464 = vmatpush.msra.mxu0 %v428
        %465 = vmatpush.msra.mxu0 %v427
        %466 = vmatpush.msra.mxu0 %v426
        %467 = vmatpush.msra.mxu0 %v425
        %468 = vmatpush.msra.mxu0 %v424
        %469 = vmatpush.msra.mxu0 %v423
        %470 = vmatpush.msra.mxu0 %v422
        %471 = vmatpush.msra.mxu0 %v421
        %472 = vmatpush.msra.mxu0 %v420
        %473 = vmatpush.msra.mxu0 %v419
        %474 = vmatmul.f32.gmra.mxu0 %v454
        %v475 = vpop.f32.mrf.mxu0
        %v476 = vadd.f32 0.0, %v475
        %477 = vdwg.mxu0
        %478 = vmatpush.msra.mxu0 %v450
        %479 = vmatpush.msra.mxu0 %v449
        %480 = vmatpush.msra.mxu0 %v448
        %481 = vmatpush.msra.mxu0 %v447
        %482 = vmatpush.msra.mxu0 %v446
        %483 = vmatpush.msra.mxu0 %v445
        %484 = vmatpush.msra.mxu0 %v444
        %485 = vmatpush.msra.mxu0 %v443
        %486 = vmatpush.msra.mxu0 %v442
        %487 = vmatpush.msra.mxu0 %v441
        %488 = vmatpush.msra.mxu0 %v440
        %489 = vmatpush.msra.mxu0 %v439
        %490 = vmatpush.msra.mxu0 %v438
        %491 = vmatpush.msra.mxu0 %v437
        %492 = vmatpush.msra.mxu0 %v436
        %493 = vmatpush.msra.mxu0 %v435
        %494 = vmatmul.f32.gmra.mxu0 %v455
        %v495 = vpop.f32.mrf.mxu0
        %v496 = vadd.f32 %v476, %v495
        %497 = vdwg.mxu0
        %v498 = vld [vmem:[%s280] sm:$0xf]
        %v499 = vld [vmem:[%s270] sm:$0x1]
        %v500 = vsub.f32 %v496, %v498
        %v502 = vperm.slane %v499, 0
        %v504 = vmul.f32 %v500, %v502
        %v505 = vand.u32 2147483647, %v504
        %vm506 = vcmask 60416
        %v507 = vsel %vm506, %v505, 0.0
        %508 = vadd.xlane.f32.xlu0 %v507
        %v509 = vpop.xlane.xlu0 %508
        %v510 = vrot.slane %v509, 4
        %v511 = vadd.f32 %v509, %v510
        %v512 = vrot.slane %v511, 2
        %v513 = vadd.f32 %v511, %v512
        %v514 = vrot.slane %v513, 1
        %v515 = vadd.f32 %v513, %v514
        %s516 = vtos %v515
        %v517 = vstv %s516
        %vm518 = vcmask 0
        %519 = vst.msk [vmem:[%s319] sm:$0x1] %vm518, %v517
        %p520 = scmp.lt.s32.totalorder %s24, 1
        %s521 = scalar_select %p520, %s24, 1
        %s522 = scalar_lea.vmem %s4, %s521
        // Predicated region
        $region53: #{tpu_custom_call.1} parent=35 // pred_check
          %p523 = pneg %p146
        $region54: #{tpu_custom_call.1} parent=35 // pred_check_branch
          %525 = sbr.rel (%p523) target = $region56
        $region55: #{tpu_custom_call.1} parent=35 // pred_region
          _
        $region56: #{tpu_custom_call.1} parent=35 // pred_fallthru
          _
      $region36: #{tpu_custom_call.1} parent=5 // pred_fallthru
        _
      %p526 = scmp.le.s32.totalorder 2, %s19
      // Predicated region
      $region57: #{tpu_custom_call.1} parent=5 // pred_check
        %p527 = pneg %p526
      $region58: #{tpu_custom_call.1} parent=5 // pred_check_branch
        %529 = sbr.rel (%p527) target = $region60
      $region59: #{tpu_custom_call.1} parent=5 // pred_region
        %s530 = ssub.s32 %s19, 2
        // Predicated region
        $region61: #{tpu_custom_call.1} parent=59 // pred_check
          %p531 = pneg %p152
        $region62: #{tpu_custom_call.1} parent=59 // pred_check_branch
          %533 = sbr.rel (%p531) target = $region64
        $region63: #{tpu_custom_call.1} parent=59 // pred_region
          %p534 = scmp.lt.s32.totalorder %s25, 1
          %s535 = scalar_select %p534, %s25, 1
          %s536 = scalar_lea.vmem %s4, %s535
        $region64: #{tpu_custom_call.1} parent=59 // pred_fallthru
          _
      $region60: #{tpu_custom_call.1} parent=5 // pred_fallthru
        _
    $region6: #{tpu_custom_call.1} parent=1 // loop_footer
      %s23 = sadd.s32 1, %s19
    $region7: #{tpu_custom_call.1} parent=1 // loop_footer_branch
      %18 = sbr.rel target = $region3
    $region8: #{tpu_custom_call.1} parent=1 // loop_exit
      _
    %537 = vsyncpa [#allocation3], 1
    %s538 = scalar_lea.sflag [#allocation3], 1
    %539 = vsyncpa %s538, 1
    %540 = vsyncpa [#allocation5], 1
    %s541 = scalar_lea.sflag [#allocation5], 1
    %542 = vsyncpa %s541, 1
    %543 = vsyncpa [#allocation8], 1
    %s544 = scalar_lea.sflag [#allocation8], 1
    %545 = vsyncpa %s544, 1

</llo_original>
